<compile_context>
chip_gen: v6e
topology: v6e:2x2x1
jax: 0.10.0
libtpu: 0.0.40
codegen_flags: <defaults>
</compile_context>

<pallas_src>
import functools
import math

import jax
import jax.numpy as jnp
from jax.experimental import pallas as pl
from jax.experimental.pallas import tpu as pltpu


def _round_up(x, m):
    return ((x + m - 1) // m) * m


def topic_forward_kernel(z_ref, gamma_ref, x_ref, *, valid_v, padded_v):
    # (tm, K) @ (K, Vp) -> (tm, Vp), bf16 operands, f32 accumulation on the MXU.
    logits = jnp.dot(z_ref[...], gamma_ref[...],
                     preferred_element_type=jnp.float32)
    if padded_v != valid_v:
        # Padded vocab columns must not participate in the softmax.
        col = jax.lax.broadcasted_iota(jnp.int32, logits.shape, 1)
        logits = jnp.where(col < valid_v, logits, jnp.float32(-1e30))
    m = jnp.max(logits, axis=-1, keepdims=True)
    e = jnp.exp(logits - m)
    denom = jnp.sum(e, axis=-1, keepdims=True)
    inv = pl.reciprocal(denom, approx=True)   # EUP slot; frees the VALU
    x_ref[...] = (e * inv).astype(x_ref.dtype)


def topic_forward(z, gamma, *, tm=512, compute_dtype=jnp.bfloat16):
    """z: (B, L, K); gamma: (1, K, V) or (K, V) -> softmax(z @ gamma) of shape (B, L, V)."""
    B, L, K = z.shape
    gamma2 = gamma.reshape(gamma.shape[-2], gamma.shape[-1])
    Kg, V = gamma2.shape
    assert Kg == K
    out_dtype = z.dtype

    M = B * L
    # Row tile: as large as possible, multiple of 16 (valid for bf16 and f32),
    # capped to the padded row count for tiny problems.
    tm_eff = min(_round_up(tm, 16), _round_up(M, 16))
    M_pad = _round_up(M, tm_eff)
    # Lane-dense output: pad the vocab axis to a multiple of 128.
    V_pad = _round_up(V, 128)

    z2 = z.reshape(M, K)
    if M_pad != M:
        z2 = jnp.pad(z2, ((0, M_pad - M), (0, 0)))
    if V_pad != V:
        gamma2 = jnp.pad(gamma2, ((0, 0), (0, V_pad - V)))
    z2 = z2.astype(compute_dtype)
    gamma2 = gamma2.astype(compute_dtype)

    # VMEM footprint: double-buffered z/x tiles + (grid-invariant) gamma.
    cbytes = jnp.dtype(compute_dtype).itemsize
    obytes = jnp.dtype(out_dtype).itemsize
    vmem_needed = (2 * (tm_eff * K * cbytes + tm_eff * V_pad * obytes)
                   + 2 * K * V_pad * cbytes)
    compiler_kwargs = dict(dimension_semantics=("parallel",))
    if vmem_needed > (24 << 20):
        # Raise the scoped VMEM limit only when the default (~32 MiB) won't fit.
        # TODO(synk): on v7x (64 MiB VMEM) a very large K*V would instead need a
        # V grid axis (tiled gamma) with an online softmax reduction.
        compiler_kwargs["vmem_limit_bytes"] = min(
            int(vmem_needed * 1.5) + (2 << 20), 96 << 20)

    kernel = functools.partial(topic_forward_kernel, valid_v=V, padded_v=V_pad)
    x2 = pl.pallas_call(
        kernel,
        out_shape=jax.ShapeDtypeStruct((M_pad, V_pad), out_dtype),
        grid_spec=pltpu.PrefetchScalarGridSpec(
            num_scalar_prefetch=0,
            grid=(M_pad // tm_eff,),
            in_specs=[
                pl.BlockSpec((tm_eff, K), lambda i: (i, 0)),   # z row tile
                # gamma: constant index_map -> not re-fetched between steps.
                pl.BlockSpec((K, V_pad), lambda i: (0, 0)),
            ],
            out_specs=pl.BlockSpec((tm_eff, V_pad), lambda i: (i, 0)),
        ),
        compiler_params=pltpu.CompilerParams(**compiler_kwargs),
    )(z2, gamma2)

    return x2[:M, :V].reshape(B, L, V)


if __name__ == "__main__":
    B, L, K, V = 2, 8, 4, 32          # batch, doc length, topics, vocab
    key = jax.random.PRNGKey(0)
    kz, kg = jax.random.split(key)

    zhat = jax.random.normal(kz, (B, L, K), dtype=jnp.float32)
    # xavier_normal_ on the (1, K, V) parameter (deterministic given the key).
    std_g = math.sqrt(2.0 / (K * V + V))
    gamma = std_g * jax.random.normal(kg, (1, K, V), dtype=jnp.float32)

    xhat = topic_forward(zhat, gamma)
    xhat = jax.block_until_ready(xhat)
    assert xhat.shape == (B, L, V)

    # Reference emulating the bf16 MXU operands with f32 accumulation.
    z_c = zhat.astype(jnp.bfloat16).astype(jnp.float32)
    g_c = gamma.reshape(K, V).astype(jnp.bfloat16).astype(jnp.float32)
    ref = jax.nn.softmax(jnp.einsum("blk,kv->blv", z_c, g_c), axis=-1)
    assert bool(jnp.allclose(xhat, ref, atol=2e-3, rtol=2e-3))

    # Loose check against the pure-f32 reference as well.
    ref_f32 = jax.nn.softmax(
        jnp.einsum("blk,kv->blv", zhat, gamma.reshape(K, V)), axis=-1)
    assert bool(jnp.allclose(xhat, ref_f32, atol=3e-2))

    print("KERNEL_OK")
</pallas_src>

<mosaic_0001>
module attributes {stable_mosaic.version = 11 : i64} {
  func.func @topic_forward_kernel(%arg0: i32, %arg1: memref<16x4xbf16, #tpu.memory_space<vmem>>, %arg2: memref<4x128xbf16, #tpu.memory_space<vmem>>, %arg3: memref<16x128xf32, #tpu.memory_space<vmem>>) attributes {dimension_semantics = [#tpu.dimension_semantics<parallel>], iteration_bounds = array<i64: 1>, scalar_prefetch = 0 : i64, scratch_operands = 0 : i64, tpu.core_type = #tpu.core_type<tc>, window_params = [{transform_indices = @transform_0, window_bounds = array<i64: 16, 4>}, {pipeline_mode = #tpu.pipeline_mode<synchronous>, transform_indices = @transform_1, window_bounds = array<i64: 4, 128>}, {transform_indices = @transform_2, window_bounds = array<i64: 16, 128>}]} {
    %c0 = arith.constant 0 : index
    %c0_0 = arith.constant 0 : index
    %0 = vector.load %arg1[%c0, %c0_0] : memref<16x4xbf16, #tpu.memory_space<vmem>>, vector<16x4xbf16>
    %c0_1 = arith.constant 0 : index
    %c0_2 = arith.constant 0 : index
    %1 = vector.load %arg2[%c0_1, %c0_2] : memref<4x128xbf16, #tpu.memory_space<vmem>>, vector<4x128xbf16>
    %cst = arith.constant dense<0.000000e+00> : vector<16x128xf32>
    %2 = tpu.matmul %0, %1, %cst {dimension_numbers = #tpu.dot_dimension_numbers<[1], [0], [0], [1], [0, 0, 1, 1], [], []>} : vector<16x4xbf16>, vector<4x128xbf16>, vector<16x128xf32> -> vector<16x128xf32>
    %3 = tpu.iota {dimensions = array<i32: 1>} : vector<16x128xi32>
    %c32_i32 = arith.constant 32 : i32
    %4 = vector.broadcast %c32_i32 : i32 to vector<16x128xi32>
    %5 = arith.cmpi slt, %3, %4 : vector<16x128xi32>
    %cst_3 = arith.constant -1.000000e+30 : f32
    %6 = vector.broadcast %cst_3 : f32 to vector<16x128xf32>
    %7 = arith.select %5, %2, %6 : vector<16x128xi1>, vector<16x128xf32>
    %cst_4 = arith.constant dense<0xFF800000> : vector<16xf32>
    %8 = vector.multi_reduction <maximumf>, %7, %cst_4 [1] : vector<16x128xf32> to vector<16xf32>
    %9 = vector.shape_cast %8 : vector<16xf32> to vector<16x1xf32>
    %10 = vector.broadcast %9 : vector<16x1xf32> to vector<16x128xf32>
    %11 = arith.subf %7, %10 : vector<16x128xf32>
    %12 = math.exp %11 : vector<16x128xf32>
    %cst_5 = arith.constant dense<0.000000e+00> : vector<16xf32>
    %13 = vector.multi_reduction <add>, %12, %cst_5 [1] : vector<16x128xf32> to vector<16xf32>
    %14 = vector.shape_cast %13 : vector<16xf32> to vector<16x1xf32>
    %15 = tpu.reciprocal %14 {approx = true} : vector<16x1xf32> -> vector<16x1xf32>
    %16 = vector.broadcast %15 : vector<16x1xf32> to vector<16x128xf32>
    %17 = arith.mulf %12, %16 : vector<16x128xf32>
    %c0_6 = arith.constant 0 : index
    %c0_7 = arith.constant 0 : index
    %18 = vector.load %arg3[%c0_6, %c0_7] : memref<16x128xf32, #tpu.memory_space<vmem>>, vector<16x128xf32>
    tpu.vector_store %arg3[%c0_6, %c0_7], %17 {strides = array<i32>} : memref<16x128xf32, #tpu.memory_space<vmem>>, vector<16x128xf32>,
    return
  }
  func.func @transform_0(%arg0: i32) -> (i32, i32) {
    %c0_i32 = arith.constant 0 : i32
    %c0_i32_0 = arith.constant 0 : i32
    return %arg0, %c0_i32 : i32, i32
  }
  func.func @transform_1(%arg0: i32) -> (i32, i32) {
    %c0_i32 = arith.constant 0 : i32
    %c0_i32_0 = arith.constant 0 : i32
    %c0_i32_1 = arith.constant 0 : i32
    return %c0_i32, %c0_i32_0 : i32, i32
  }
  func.func @transform_2(%arg0: i32) -> (i32, i32) {
    %c0_i32 = arith.constant 0 : i32
    %c0_i32_0 = arith.constant 0 : i32
    return %arg0, %c0_i32 : i32, i32
  }
}

</mosaic_0001>

<llo_original>
// kernel: tpu_custom_call.1
$region0: #{tpu_custom_call.1}
  #allocation0 [shape = 'u32[]', space=smem, size = 0x4, offset = 0x4, fixed_abs, tag = 'smem constant byte address 0x4 - core index']
  #allocation1 [shape = 'u32[144,128]{1,0:T(1,128)}', space=vmem, size = 0x12000, scoped, tag = 'internal scratch']
  %s0 = inlined_call_operand.vmem [shape: bf16[16,4], index: 0, kind: input, shape index: {}]
  %s1 = inlined_call_operand.vmem [shape: bf16[4,128], index: 1, kind: input, shape index: {}]
  %s2 = inlined_call_operand.hbm [shape: f32[16,128], index: 2, kind: output, shape index: {}]
  %s3 = sld [smem:[#allocation0]]
  $region18: #{tpu_custom_call.1} parent=0
    _
  %s5 = ssub.s32 1, %s3
  %s6 = scalar_select 0, %s5, %s3
  $region1: #{tpu_custom_call.1} parent=0
    #allocation2 [shape = 'u8[8192]{0}', space=vmem, size = 0x2000, scoped, tag = 'output window, operand 0, single buffered']
    #allocation3 [shape = 's32[1]{0}', space=sflag, size = 0x4, scoped, tag = 'scoped memory for tpu_custom_call.1']
    %7 = vsyncpa [#allocation3], 0
    // Predicated region
    $region2: #{tpu_custom_call.1} parent=1 // pred_check
      _
    $region3: #{tpu_custom_call.1} parent=1 // pred_check_branch
      %9 = sbr.rel (0) target = $region5
    $region4: #{tpu_custom_call.1} parent=1 // pred_region
      _
    $region5: #{tpu_custom_call.1} parent=1 // pred_fallthru
      _
    // Predicated region
    $region6: #{tpu_custom_call.1} parent=1 // pred_check
      _
    $region7: #{tpu_custom_call.1} parent=1 // pred_check_branch
      %11 = sbr.rel (0) target = $region9
    $region8: #{tpu_custom_call.1} parent=1 // pred_region
      _
    $region9: #{tpu_custom_call.1} parent=1 // pred_fallthru
      _
    %v13 = vld [vmem:[%s0] sm:$0xf]
    %v14 = vld [vmem:[%s0 + $0x4] sm:$0xf]
    %v15 = vld [vmem:[%s1] sm:$0x3]
    %v18 = vunpack.c.l.b16 %v13
    %v19 = vunpack.c.l.b16 %v14
    %v20 = vpack.c.b16 %v19, %v18
    %vm21 = vcmask 31744
    %v23 = vsel %vm21, %v20, 0
    %vm25 = vcmask 1041408
    %v27 = vsel %vm25, %v15, 0
    %29 = vmatprep.subr.bf16.mxu0 0
    %30 = vmatpush1.bf16.msra.mxu0 0
    %31 = vmatprep.subr.bf16.mxu0 0
    %32 = vmatpush1.bf16.msra.mxu0 0
    %33 = vmatprep.subr.bf16.mxu0 0
    %34 = vmatpush1.bf16.msra.mxu0 0
    %35 = vmatprep.subr.bf16.mxu0 0
    %36 = vmatpush1.bf16.msra.mxu0 0
    %37 = vmatprep.subr.bf16.mxu0 0
    %38 = vmatpush1.bf16.msra.mxu0 0
    %39 = vmatprep.subr.bf16.mxu0 0
    %40 = vmatpush1.bf16.msra.mxu0 0
    %41 = vmatprep.subr.bf16.mxu0 0
    %42 = vmatpush1.bf16.msra.mxu0 0
    %43 = vmatprep.subr.bf16.mxu0 0
    %44 = vmatpush1.bf16.msra.mxu0 %v27
    %45 = vmatprep.subr.bf16.mxu0 0
    %46 = vmatpush2.bf16.msra.mxu0 0
    %47 = vmatprep.subr.bf16.mxu0 0
    %48 = vmatpush2.bf16.msra.mxu0 0
    %49 = vmatprep.subr.bf16.mxu0 0
    %50 = vmatpush2.bf16.msra.mxu0 0
    %51 = vmatprep.subr.bf16.mxu0 0
    %52 = vmatpush2.bf16.msra.mxu0 0
    %53 = vmatprep.subr.bf16.mxu0 0
    %54 = vmatpush2.bf16.msra.mxu0 0
    %55 = vmatprep.subr.bf16.mxu0 0
    %56 = vmatpush2.bf16.msra.mxu0 0
    %57 = vmatprep.subr.bf16.mxu0 0
    %58 = vmatpush2.bf16.msra.mxu0 0
    %59 = vmatprep.subr.bf16.mxu0 0
    %60 = vmatpush2.bf16.msra.mxu0 0
    %61 = vmatprep.mubr.bf16.mxu0 0
    %62 = vmatmul.mubr.bf16.gmra.mxu0 %v23
    %v63 = vpop.f32.mrf.mxu0
    %v64 = vadd.f32 0.0, %v63
    %v65 = vpop.f32.mrf.mxu0
    %v66 = vpop.f32.mrf.mxu0
    %v67 = vadd.f32 0.0, %v66
    %v68 = vpop.f32.mrf.mxu0
    %69 = vdwg.mxu0
    %v70 = vlaneseq
    %v71 = vand.u32 %v70, 127
    %vm72 = vcmp.lt.s32.totalorder %v71, 32
    %v73 = vsel %vm72, %v64, -1e+30
    %v74 = vsel %vm72, %v67, -1e+30
    %75 = vmax.xlane.f32.xlu0 %v73
    %v76 = vpop.xlane.xlu0 %75
    %77 = vmax.xlane.f32.xlu0 %v74
    %v78 = vpop.xlane.xlu0 %77
    %v79 = vsub.f32 %v73, %v76
    %v80 = vsub.f32 %v74, %v78
    %v81 = vmul.f32 %v79, 1.442695
    %v82 = vpow.pop %v81
    %v83 = vmul.f32 %v80, 1.442695
    %v84 = vpow.pop %v83
    %85 = vadd.xlane.f32.xlu0 %v82
    %v86 = vpop.xlane.xlu0 %85
    %87 = vadd.xlane.f32.xlu0 %v84
    %v88 = vpop.xlane.xlu0 %87
    %v89 = vrcp.pop %v86
    %v90 = vrcp.pop %v88
    %v91 = vmul.f32 %v82, %v89
    %v92 = vmul.f32 %v84, %v90
    %93 = vst [vmem:[#allocation2] sm:$0xff] %v91
    %94 = vst [vmem:[#allocation2 + $0x8] sm:$0xff] %v92
    // Predicated region
    $region10: #{tpu_custom_call.1} parent=1 // pred_check
      _
    $region11: #{tpu_custom_call.1} parent=1 // pred_check_branch
      %96 = sbr.rel (0) target = $region13
    $region12: #{tpu_custom_call.1} parent=1 // pred_region
      %s98 = ssub.s32 256, 256
      %99 = vsyncadd [#allocation3], %s98
      %s100 = sshll.u32 [#allocation2], 4
      %s101 = int_to_ptr.vmem [resolvable:$true] %s100
      %106 = dma.vmem_to_hbm [thread:$0]  %s101, 256, %s2, [#allocation3], 128, 128, 8
    $region13: #{tpu_custom_call.1} parent=1 // pred_fallthru
      _
    // Predicated region
    $region14: #{tpu_custom_call.1} parent=1 // pred_check
      _
    $region15: #{tpu_custom_call.1} parent=1 // pred_check_branch
      %108 = sbr.rel (0) target = $region17
    $region16: #{tpu_custom_call.1} parent=1 // pred_region
      %109 = dma.done [#allocation3], 256
    $region17: #{tpu_custom_call.1} parent=1 // pred_fallthru
      _
    %110 = vsyncpa [#allocation3], 1

</llo_original>
